<compile_context>
chip_gen: v5e
topology: v5e:2x2
jax: 0.10.0
libtpu: 0.0.40
codegen_flags: <defaults>
</compile_context>

<pallas_src>
import jax
import jax.numpy as jnp
from jax.experimental import pallas as pl
from jax.experimental.pallas import tpu as pltpu


def spatial_attention_kernel(x_ref, w_ref, b_ref, o_ref):
    # x_ref: (1, C, T) tile of the input viewed as (N, C, H*W)
    # w_ref: (C, 1)    conv1 weight column (f32, resident in VMEM)
    # b_ref: (1,)      conv1 bias (f32, SMEM scalar)
    # o_ref: (1, C, T) output tile
    x = x_ref[0]                                   # (C, T)
    xf = x.astype(jnp.float32)
    w = w_ref[...]                                 # (C, 1), broadcast over lanes

    # 1x1 conv: per-pixel dot product over channels (sublane-axis reduce, XLU).
    logit = jnp.sum(xf * w, axis=0, keepdims=True) + b_ref[0]   # (1, T)
    attn = jax.nn.sigmoid(logit)                                # (1, T), EUP

    # Gate: broadcast attention over channels (sublanes); lane-dense store.
    o_ref[0] = (xf * attn).astype(o_ref.dtype)


def _choose_hw_tile(hw, c, itemsize, target_block_bytes):
    """Largest lane tile that is a multiple of 128, divides hw, and keeps the
    (C, T) block under target_block_bytes. Falls back to the full extent
    (always legal: block dim == full array dim)."""
    if hw % 128 != 0:
        return hw
    max_t = max(128, (target_block_bytes // max(1, c * itemsize)) // 128 * 128)
    best = 128
    for t in range(128, min(hw, max_t) + 1, 128):
        if hw % t == 0:
            best = t
    return best


def spatial_attention(x_nchw, weight, bias, *, target_block_bytes=4 << 20):
    """x_nchw: (N, C, H, W); weight: (1, C, 1, 1); bias: (1,). Returns (N, C, H, W)."""
    N, C, H, W = x_nchw.shape
    HW = H * W

    # Free reshapes only -- no NCHW<->NHWC transposes, no extra HBM traffic.
    x3 = x_nchw.reshape(N, C, HW)
    w_col = weight.reshape(C, 1).astype(jnp.float32)
    b_vec = bias.reshape(1).astype(jnp.float32)

    t_hw = _choose_hw_tile(HW, C, x_nchw.dtype.itemsize, target_block_bytes)
    grid = (N, HW // t_hw)   # both axes independent -> shardable across v7x's 2 TCs

    block_bytes = C * t_hw * x_nchw.dtype.itemsize
    # 2 input buffers + 2 output buffers + weight + slack; raise scoped VMEM
    # explicitly so large blocks also work on v5e (16 MiB default scoped).
    vmem_limit = max(32 << 20, 4 * block_bytes + (4 << 20))

    out3 = pl.pallas_call(
        spatial_attention_kernel,
        out_shape=jax.ShapeDtypeStruct((N, C, HW), x_nchw.dtype),
        grid_spec=pltpu.PrefetchScalarGridSpec(
            num_scalar_prefetch=0,
            grid=grid,
            in_specs=[
                pl.BlockSpec((1, C, t_hw), lambda n, t: (n, 0, t)),   # activations
                pl.BlockSpec((C, 1), lambda n, t: (0, 0)),            # weight (resident)
                pl.BlockSpec(memory_space=pltpu.MemorySpace.SMEM),    # bias scalar
            ],
            out_specs=pl.BlockSpec((1, C, t_hw), lambda n, t: (n, 0, t)),
        ),
        compiler_params=pltpu.CompilerParams(
            dimension_semantics=("parallel", "parallel"),
            vmem_limit_bytes=vmem_limit,
        ),
    )(x3, w_col, b_vec)

    return out3.reshape(N, C, H, W)


def spatial_attention_ref(x_nchw, weight, bias):
    # Pure-JAX reference of the PyTorch forward.
    attn = jnp.einsum("nchw,oc->nohw", x_nchw, weight.reshape(1, -1)) + bias.reshape(1, 1, 1, 1)
    attn = jax.nn.sigmoid(attn)
    return x_nchw * attn


if __name__ == "__main__":
    key = jax.random.PRNGKey(0)
    kx, kw, kb = jax.random.split(key, 3)

    N, C, H, W = 2, 32, 16, 16   # small, consistent with the module (in_channels=C)
    x = jax.random.normal(kx, (N, C, H, W), dtype=jnp.float32)
    # deterministic synthetic parameters matching nn.Conv2d(C, 1, kernel_size=1)
    weight = jax.random.normal(kw, (1, C, 1, 1), dtype=jnp.float32) * 0.05
    bias = jax.random.normal(kb, (1,), dtype=jnp.float32) * 0.05

    out = spatial_attention(x, weight, bias)
    out = jax.block_until_ready(out)

    ref = spatial_attention_ref(x, weight, bias)
    assert out.shape == (N, C, H, W)
    assert jnp.allclose(out, ref, atol=1e-5, rtol=1e-5), "mismatch vs reference"

    print("KERNEL_OK")
</pallas_src>

<mosaic_0001>
module attributes {stable_mosaic.version = 11 : i64} {
  func.func @spatial_attention_kernel(%arg0: i32, %arg1: i32, %arg2: memref<1x32x256xf32, #tpu.memory_space<vmem>>, %arg3: memref<32x1xf32, #tpu.memory_space<vmem>>, %arg4: memref<1xf32, #tpu.memory_space<smem>>, %arg5: memref<1x32x256xf32, #tpu.memory_space<vmem>>) attributes {dimension_semantics = [#tpu.dimension_semantics<parallel>, #tpu.dimension_semantics<parallel>], iteration_bounds = array<i64: 2, 1>, scalar_prefetch = 0 : i64, scratch_operands = 0 : i64, tpu.core_type = #tpu.core_type<tc>, window_params = [{transform_indices = @transform_0, window_bounds = array<i64: 1, 32, 256>}, {pipeline_mode = #tpu.pipeline_mode<synchronous>, transform_indices = @transform_1, window_bounds = array<i64: 32, 1>}, {transform_indices = @transform_2, window_bounds = array<i64: 1>}, {transform_indices = @transform_3, window_bounds = array<i64: 1, 32, 256>}]} {
    %c0 = arith.constant 0 : index
    %c0_0 = arith.constant 0 : index
    %c0_1 = arith.constant 0 : index
    %0 = vector.load %arg2[%c0, %c0_0, %c0_1] : memref<1x32x256xf32, #tpu.memory_space<vmem>>, vector<1x32x256xf32>
    %1 = vector.shape_cast %0 : vector<1x32x256xf32> to vector<32x256xf32>
    %c0_2 = arith.constant 0 : index
    %c0_3 = arith.constant 0 : index
    %2 = vector.load %arg3[%c0_2, %c0_3] : memref<32x1xf32, #tpu.memory_space<vmem>>, vector<32x1xf32>
    %3 = vector.broadcast %2 : vector<32x1xf32> to vector<32x256xf32>
    %4 = arith.mulf %1, %3 : vector<32x256xf32>
    %cst = arith.constant dense<0.000000e+00> : vector<256xf32>
    %5 = vector.multi_reduction <add>, %4, %cst [0] : vector<32x256xf32> to vector<256xf32>
    %6 = vector.shape_cast %5 : vector<256xf32> to vector<1x256xf32>
    %c0_4 = arith.constant 0 : index
    %7 = memref.load %arg4[%c0_4] : memref<1xf32, #tpu.memory_space<smem>>
    %8 = vector.broadcast %7 : f32 to vector<1x256xf32>
    %9 = arith.addf %6, %8 : vector<1x256xf32>
    %10 = arith.negf %9 : vector<1x256xf32>
    %11 = math.exp %10 : vector<1x256xf32>
    %cst_5 = arith.constant 1.000000e+00 : f32
    %12 = vector.broadcast %cst_5 : f32 to vector<1x256xf32>
    %13 = arith.addf %12, %11 : vector<1x256xf32>
    %14 = arith.divf %12, %13 : vector<1x256xf32>
    %15 = vector.broadcast %14 : vector<1x256xf32> to vector<32x256xf32>
    %16 = arith.mulf %1, %15 : vector<32x256xf32>
    %c0_6 = arith.constant 0 : index
    %c0_7 = arith.constant 0 : index
    %c0_8 = arith.constant 0 : index
    %17 = vector.load %arg5[%c0_6, %c0_7, %c0_8] : memref<1x32x256xf32, #tpu.memory_space<vmem>>, vector<1x32x256xf32>
    %18 = vector.shape_cast %17 : vector<1x32x256xf32> to vector<32x256xf32>
    %19 = vector.shape_cast %16 : vector<32x256xf32> to vector<1x32x256xf32>
    tpu.vector_store %arg5[%c0_6, %c0_7, %c0_8], %19 {strides = array<i32>} : memref<1x32x256xf32, #tpu.memory_space<vmem>>, vector<1x32x256xf32>,
    return
  }
  func.func @transform_0(%arg0: i32, %arg1: i32) -> (i32, i32, i32) {
    %c0_i32 = arith.constant 0 : i32
    %c0_i32_0 = arith.constant 0 : i32
    return %arg0, %c0_i32, %arg1 : i32, i32, i32
  }
  func.func @transform_1(%arg0: i32, %arg1: i32) -> (i32, i32) {
    %c0_i32 = arith.constant 0 : i32
    %c0_i32_0 = arith.constant 0 : i32
    %c0_i32_1 = arith.constant 0 : i32
    return %c0_i32, %c0_i32_0 : i32, i32
  }
  func.func @transform_2(%arg0: i32, %arg1: i32) -> i32 {
    %c0_i32 = arith.constant 0 : i32
    %c0_i32_0 = arith.constant 0 : i32
    return %c0_i32 : i32
  }
  func.func @transform_3(%arg0: i32, %arg1: i32) -> (i32, i32, i32) {
    %c0_i32 = arith.constant 0 : i32
    %c0_i32_0 = arith.constant 0 : i32
    return %arg0, %c0_i32, %arg1 : i32, i32, i32
  }
}

</mosaic_0001>

<llo_original>
// kernel: tpu_custom_call.1
$region0: #{tpu_custom_call.1}
  #allocation0 [shape = 'u32[]', space=smem, size = 0x4, offset = 0x4, fixed_abs, tag = 'smem constant byte address 0x4 - core index']
  #allocation1 [shape = 'u32[72,128]{1,0:T(1,128)}', space=vmem, size = 0x9000, scoped, tag = 'internal scratch']
  #allocation2 [shape = 'f32[1]{0:T(128)S(6)}', space=smem, size = 0x200, scoped, tag = 'scoped memory for tpu_custom_call.1']
  %s0 = inlined_call_operand.hbm [shape: f32[2,32,256], index: 0, kind: input, shape index: {}]
  %s1 = inlined_call_operand.vmem [shape: f32[32,1], index: 1, kind: input, shape index: {}]
  %s2 = inlined_call_operand.<no memory space> [shape: f32[1], index: 2, kind: input, shape index: {}]
  %s3 = inlined_call_operand.hbm [shape: f32[2,32,256], index: 3, kind: output, shape index: {}]
  %s4 = sld [smem:[#allocation0]]
  $region49: #{tpu_custom_call.1} parent=0
    _
  %s6 = ssub.s32 1, %s4
  %s7 = scalar_select 0, %s6, %s4
  %8 = sst [smem:[#allocation2]] %s2
  $region1: #{tpu_custom_call.1} parent=0
    #allocation3 [shape = 'u8[65536]{0}', space=vmem, size = 0x10000, scoped, tag = 'input window, operand 0']
    #allocation4 [shape = 's32[2]{0}', space=sflag, size = 0x8, scoped, tag = 'scoped memory for tpu_custom_call.1']
    #allocation5 [shape = 's32[2]{0}', space=sflag, size = 0x8, scoped, tag = 'scoped memory for tpu_custom_call.1']
    #allocation6 [shape = 'u8[65536]{0}', space=vmem, size = 0x10000, scoped, tag = 'output window, operand 0']
    %9 = vsyncpa [#allocation4], 0
    %s10 = scalar_lea.sflag [#allocation4], 1
    %11 = vsyncpa %s10, 0
    %12 = vsyncpa [#allocation5], 0
    %s13 = scalar_lea.sflag [#allocation5], 1
    %14 = vsyncpa %s13, 0
    loop: start=0, step=1, limit=4
    $region2: #{tpu_custom_call.1} parent=1 // loop_pre_header
      _
    $region3: #{tpu_custom_call.1} parent=1 // loop_header
      %s16 = sphi 0, %s20
      %p17 = scmp.ge.s32.totalorder %s16, 4
      %s23 = sphi 0, %s35
      %s24 = sphi 0, %s31
      %s25 = sphi 0, %s23
      %s26 = sphi 0, %s24
      %s27 = sphi 0, %s25
      %s28 = sphi 0, %s26
      %s40 = sphi 0, %s42
      %s43 = sphi 0, %s40
      %s44 = sphi 0, %s43
      %s60 = sphi 0, %s44
      %s64 = sphi 0, %s64
      %s66 = sphi 0, %s64
      %s67 = sphi 0, %s66
      %s81 = sphi 0, %s67
      %s85 = sphi 0, %s85
      %s87 = sphi 0, %s85
      %s88 = sphi 0, %s87
      %s102 = sphi 0, %s88
      %s110 = sphi 0, %s112
      %s113 = sphi 0, %s110
      %s114 = sphi 0, %s113
      %s130 = sphi 0, %s114
    $region4: #{tpu_custom_call.1} parent=1 // loop_header_branch
      %19 = sbr.rel (%p17) target = $region8
    $region5: #{tpu_custom_call.1} parent=1 // loop_body
      %s21 = ssub.s32 %s16, 1
      %s22 = ssub.s32 %s16, 2
      %s29 = sadd.s32 1, %s24
      %p30 = scmp.ge.s32.totalorder %s29, 1
      %s31 = scalar_select %p30, 0, %s29
      %s32 = sadd.s32 1, %s23
      %s33 = scalar_select %p30, %s32, %s23
      %p34 = scmp.ge.s32.totalorder %s33, 2
      %s35 = scalar_select %p34, 0, %s33
      %s36 = ssub.s32 %s23, %s35
      %s37 = ssub.s32 %s24, %s31
      %s38 = sor.u32 %s36, %s37
      %p39 = scmp.eq.s32.totalorder %s38, 0
      %s41 = sadd.s32 %s40, 1
      %s42 = scalar_select %p39, %s40, %s41
      %p45 = pneg %p39
      %p46 = scmp.eq.s32.totalorder %s16, 1
      %p47 = por %p45, %p46
      %p48 = scmp.ne.s32.totalorder %s40, %s43
      %p49 = scmp.eq.s32.totalorder %s16, 0
      %p50 = por %p48, %p49
      %p51 = scmp.ne.s32.totalorder %s40, %s43
      %p52 = scmp.eq.s32.totalorder %s21, 1
      %p53 = por %p51, %p52
      %p54 = scmp.ne.s32.totalorder %s43, %s44
      %p55 = scmp.eq.s32.totalorder %s21, 0
      %p56 = por %p54, %p55
      %p57 = scmp.ne.s32.totalorder %s43, %s44
      %p58 = scmp.eq.s32.totalorder %s22, 1
      %p59 = por %p57, %p58
      %p61 = scmp.ne.s32.totalorder %s44, %s60
      %p62 = scmp.eq.s32.totalorder %s22, 0
      %p63 = por %p61, %p62
      %s65 = sadd.s32 %s64, 1
      %p68 = scmp.eq.s32.totalorder %s16, 1
      %p69 = scmp.ne.s32.totalorder %s64, %s66
      %p70 = scmp.eq.s32.totalorder %s16, 0
      %p71 = por %p69, %p70
      %p72 = scmp.ne.s32.totalorder %s64, %s66
      %p73 = scmp.eq.s32.totalorder %s21, 1
      %p74 = por %p72, %p73
      %p75 = scmp.ne.s32.totalorder %s66, %s67
      %p76 = scmp.eq.s32.totalorder %s21, 0
      %p77 = por %p75, %p76
      %p78 = scmp.ne.s32.totalorder %s66, %s67
      %p79 = scmp.eq.s32.totalorder %s22, 1
      %p80 = por %p78, %p79
      %p82 = scmp.ne.s32.totalorder %s67, %s81
      %p83 = scmp.eq.s32.totalorder %s22, 0
      %p84 = por %p82, %p83
      %s86 = sadd.s32 %s85, 1
      %p89 = scmp.eq.s32.totalorder %s16, 1
      %p90 = scmp.ne.s32.totalorder %s85, %s87
      %p91 = scmp.eq.s32.totalorder %s16, 0
      %p92 = por %p90, %p91
      %p93 = scmp.ne.s32.totalorder %s85, %s87
      %p94 = scmp.eq.s32.totalorder %s21, 1
      %p95 = por %p93, %p94
      %p96 = scmp.ne.s32.totalorder %s87, %s88
      %p97 = scmp.eq.s32.totalorder %s21, 0
      %p98 = por %p96, %p97
      %p99 = scmp.ne.s32.totalorder %s87, %s88
      %p100 = scmp.eq.s32.totalorder %s22, 1
      %p101 = por %p99, %p100
      %p103 = scmp.ne.s32.totalorder %s88, %s102
      %p104 = scmp.eq.s32.totalorder %s22, 0
      %p105 = por %p103, %p104
      %s106 = ssub.s32 %s23, %s35
      %s107 = ssub.s32 %s24, %s31
      %s108 = sor.u32 %s106, %s107
      %p109 = scmp.eq.s32.totalorder %s108, 0
      %s111 = sadd.s32 %s110, 1
      %s112 = scalar_select %p109, %s110, %s111
      %p115 = pneg %p109
      %p116 = scmp.eq.s32.totalorder %s16, 1
      %p117 = por %p115, %p116
      %p118 = scmp.ne.s32.totalorder %s110, %s113
      %p119 = scmp.eq.s32.totalorder %s16, 0
      %p120 = por %p118, %p119
      %p121 = scmp.ne.s32.totalorder %s110, %s113
      %p122 = scmp.eq.s32.totalorder %s21, 1
      %p123 = por %p121, %p122
      %p124 = scmp.ne.s32.totalorder %s113, %s114
      %p125 = scmp.eq.s32.totalorder %s21, 0
      %p126 = por %p124, %p125
      %p127 = scmp.ne.s32.totalorder %s113, %s114
      %p128 = scmp.eq.s32.totalorder %s22, 1
      %p129 = por %p127, %p128
      %p131 = scmp.ne.s32.totalorder %s114, %s130
      %p132 = scmp.eq.s32.totalorder %s22, 0
      %p133 = por %p131, %p132
      %p134 = scmp.le.s32.totalorder 1, %s16
      %p135 = scmp.lt.s32.totalorder %s16, 3
      %p136 = pnand %p134, %p135
      %p137 = pneg %p136
      // Predicated region
      $region9: #{tpu_custom_call.1} parent=5 // pred_check
        _
      $region10: #{tpu_custom_call.1} parent=5 // pred_check_branch
        %139 = sbr.rel (%p136) target = $region12
      $region11: #{tpu_custom_call.1} parent=5 // pred_region
        %s140 = ssub.s32 %s16, 1
        // Predicated region
        $region13: #{tpu_custom_call.1} parent=11 // pred_check
          %p141 = pneg %p77
        $region14: #{tpu_custom_call.1} parent=11 // pred_check_branch
          %143 = sbr.rel (%p141) target = $region16
        $region15: #{tpu_custom_call.1} parent=11 // pred_region
          _
        $region16: #{tpu_custom_call.1} parent=11 // pred_fallthru
          _
        // Predicated region
        $region17: #{tpu_custom_call.1} parent=11 // pred_check
          %p144 = pneg %p98
        $region18: #{tpu_custom_call.1} parent=11 // pred_check_branch
          %146 = sbr.rel (%p144) target = $region20
        $region19: #{tpu_custom_call.1} parent=11 // pred_region
          _
        $region20: #{tpu_custom_call.1} parent=11 // pred_fallthru
          _
      $region12: #{tpu_custom_call.1} parent=5 // pred_fallthru
        _
      %p147 = scmp.lt.s32.totalorder %s16, 2
      // Predicated region
      $region21: #{tpu_custom_call.1} parent=5 // pred_check
        %p148 = pneg %p147
      $region22: #{tpu_custom_call.1} parent=5 // pred_check_branch
        %150 = sbr.rel (%p148) target = $region24
      $region23: #{tpu_custom_call.1} parent=5 // pred_region
        // Predicated region
        $region25: #{tpu_custom_call.1} parent=23 // pred_check
          %p151 = pneg %p50
        $region26: #{tpu_custom_call.1} parent=23 // pred_check_branch
          %153 = sbr.rel (%p151) target = $region28
        $region27: #{tpu_custom_call.1} parent=23 // pred_region
          %s154 = sand.u32 %s40, 1
          %s155 = scalar_lea.sflag [#allocation4], %s154
          %s156 = sand.u32 %s40, 1
          %s157 = smul.addr %s156, 64
          %s158 = scalar_lea.vmem [#allocation3], %s157
          %s159 = smul.u32 2, %s24
          %161 = vsyncadd %s155, 0
          %s162 = smul.addr %s23, 8
          %s163 = sadd.s32 %s159, %s162
          %s164 = smul.addr %s163, 8
          %s165 = scalar_lea.hbm %s0, %s164
          %s166 = sshll.u32 %s165, 4
          %s167 = int_to_ptr.hbm [resolvable:$true] %s166
          %s168 = sshll.u32 %s158, 4
          %s169 = int_to_ptr.vmem [resolvable:$true] %s168
          %174 = dma.hbm_to_vmem [thread:$0]  %s167, 1024, %s169, %s155, 256, 256, 16
        $region28: #{tpu_custom_call.1} parent=23 // pred_fallthru
          _
      $region24: #{tpu_custom_call.1} parent=5 // pred_fallthru
        _
      %p175 = scmp.le.s32.totalorder 1, %s16
      %p176 = scmp.lt.s32.totalorder %s16, 3
      %p177 = pnand %p175, %p176
      %p178 = pneg %p177
      // Predicated region
      $region29: #{tpu_custom_call.1} parent=5 // pred_check
        _
      $region30: #{tpu_custom_call.1} parent=5 // pred_check_branch
        %180 = sbr.rel (%p177) target = $region32
      $region31: #{tpu_custom_call.1} parent=5 // pred_region
        %s181 = ssub.s32 %s16, 1
        %s182 = sand.u32 %s43, 1
        %s183 = scalar_lea.sflag [#allocation4], %s182
        %s184 = sand.u32 %s43, 1
        %s185 = smul.addr %s184, 64
        %s186 = scalar_lea.vmem [#allocation3], %s185
        // Predicated region
        $region33: #{tpu_custom_call.1} parent=31 // pred_check
          %p187 = pneg %p56
        $region34: #{tpu_custom_call.1} parent=31 // pred_check_branch
          %189 = sbr.rel (%p187) target = $region36
        $region35: #{tpu_custom_call.1} parent=31 // pred_region
          %191 = dma.done %s183, 1024
        $region36: #{tpu_custom_call.1} parent=31 // pred_fallthru
          _
        %s192 = sand.u32 %s43, 1
        %s193 = scalar_lea.sflag [#allocation4], %s192
        %s194 = sand.u32 %s43, 1
        %s195 = smul.addr %s194, 64
        %s196 = scalar_lea.vmem [#allocation3], %s195
        %p197 = pneg %p56
        %p198 = pneg %p53
        %p199 = pneg %p77
        %p200 = pneg %p74
        %p201 = pneg %p98
        %p202 = pneg %p95
        %p203 = pneg %p126
        %p204 = pneg %p123
        %s205 = sand.u32 %s113, 1
        %s206 = scalar_lea.sflag [#allocation5], %s205
        %s207 = sand.u32 %s113, 1
        %s208 = smul.addr %s207, 64
        %s209 = scalar_lea.vmem [#allocation6], %s208
        %s210 = smul.u32 2, %s26
        %s211 = smul.u32 2, %s26
        %v212 = vld [vmem:[%s186] sm:$0xff]
        %v213 = vld [vmem:[%s186 + $0x8] sm:$0xff]
        %v214 = vld [vmem:[%s186 + $0x10] sm:$0xff]
        %v215 = vld [vmem:[%s186 + $0x18] sm:$0xff]
        %v216 = vld [vmem:[%s186 + $0x20] sm:$0xff]
        %v217 = vld [vmem:[%s186 + $0x28] sm:$0xff]
        %v218 = vld [vmem:[%s186 + $0x30] sm:$0xff]
        %v219 = vld [vmem:[%s186 + $0x38] sm:$0xff]
        %v220 = vld [vmem:[%s1] sm:$0xff]
        %v221 = vld [vmem:[%s1 + $0x8] sm:$0xff]
        %v222 = vld [vmem:[%s1 + $0x10] sm:$0xff]
        %v223 = vld [vmem:[%s1 + $0x18] sm:$0xff]
        %225 = vset.pattern.permute.xlu0 0
        %226 = vperm.xlu0 %225, %v220
        %v227 = vpop.permute.xlu0 %226
        %230 = vset.pattern.permute.xlu0 0
        %231 = vperm.xlu0 %230, %v221
        %v232 = vpop.permute.xlu0 %231
        %235 = vset.pattern.permute.xlu0 0
        %236 = vperm.xlu0 %235, %v222
        %v237 = vpop.permute.xlu0 %236
        %240 = vset.pattern.permute.xlu0 0
        %241 = vperm.xlu0 %240, %v223
        %v242 = vpop.permute.xlu0 %241
        %v244 = vmul.f32 %v212, %v227
        %v245 = vmul.f32 %v213, %v227
        %v246 = vmul.f32 %v214, %v232
        %v247 = vmul.f32 %v215, %v232
        %v248 = vmul.f32 %v216, %v237
        %v249 = vmul.f32 %v217, %v237
        %v250 = vmul.f32 %v218, %v242
        %v251 = vmul.f32 %v219, %v242
        %v252 = vadd.f32 %v244, %v246
        %v253 = vadd.f32 %v252, %v248
        %v254 = vadd.f32 %v253, %v250
        %v255 = vrot.slane %v254, 4
        %v256 = vadd.f32 %v254, %v255
        %v257 = vrot.slane %v256, 2
        %v258 = vadd.f32 %v256, %v257
        %v259 = vrot.slane %v258, 1
        %v260 = vadd.f32 %v258, %v259
        %v261 = vadd.f32 %v245, %v247
        %v262 = vadd.f32 %v261, %v249
        %v263 = vadd.f32 %v262, %v251
        %v264 = vrot.slane %v263, 4
        %v265 = vadd.f32 %v263, %v264
        %v266 = vrot.slane %v265, 2
        %v267 = vadd.f32 %v265, %v266
        %v268 = vrot.slane %v267, 1
        %v269 = vadd.f32 %v267, %v268
        %s270 = sld [smem:[#allocation2]]
        %v271 = vstv %s270
        %v272 = vadd.f32 %v260, %v271
        %v273 = vadd.f32 %v269, %v271
        %v274 = vxor.u32 %v272, 2147483648
        %v275 = vxor.u32 %v273, 2147483648
        %v276 = vmul.f32 %v274, 1.442695
        %v277 = vpow.pop %v276
        %v278 = vmul.f32 %v275, 1.442695
        %v279 = vpow.pop %v278
        %v280 = vadd.f32 %v277, 1.0
        %v281 = vadd.f32 %v279, 1.0
        %v282 = vrcp.pop %v280
        %v283 = vmul.f32 %v280, %v282
        %v284 = vsub.f32 1.0, %v283
        %v285 = vmul.f32 %v282, %v284
        %v286 = vadd.f32 %v282, %v285
        %vm287 = vweird.f32 %v280
        %vm288 = vweird.f32 %v282
        %vm289 = vmor %vm287, %vm288
        %v290 = vsel %vm289, %v282, %v286
        %v291 = vand.u32 2147483647, %v280
        %vm292 = vcmp.eq.f32.partialorder %v291, 8.507059e+37
        %v293 = vand.u32 %v280, 2147483648
        %v294 = vor.u32 1.1754944e-38, %v293
        %v295 = vsel %vm292, %v294, %v290
        %v296 = vmul.f32 1.0, %v295
        %v297 = vrcp.pop %v281
        %v298 = vmul.f32 %v281, %v297
        %v299 = vsub.f32 1.0, %v298
        %v300 = vmul.f32 %v297, %v299
        %v301 = vadd.f32 %v297, %v300
        %vm302 = vweird.f32 %v281
        %vm303 = vweird.f32 %v297
        %vm304 = vmor %vm302, %vm303
        %v305 = vsel %vm304, %v297, %v301
        %v306 = vand.u32 2147483647, %v281
        %vm307 = vcmp.eq.f32.partialorder %v306, 8.507059e+37
        %v308 = vand.u32 %v281, 2147483648
        %v309 = vor.u32 1.1754944e-38, %v308
        %v310 = vsel %vm307, %v309, %v305
        %v311 = vmul.f32 1.0, %v310
        %v312 = vmul.f32 %v212, %v296
        %v313 = vmul.f32 %v213, %v311
        %v314 = vmul.f32 %v214, %v296
        %v315 = vmul.f32 %v215, %v311
        %v316 = vmul.f32 %v216, %v296
        %v317 = vmul.f32 %v217, %v311
        %v318 = vmul.f32 %v218, %v296
        %v319 = vmul.f32 %v219, %v311
        %320 = vst [vmem:[%s209] sm:$0xff] %v312
        %321 = vst [vmem:[%s209 + $0x8] sm:$0xff] %v313
        %322 = vst [vmem:[%s209 + $0x10] sm:$0xff] %v314
        %323 = vst [vmem:[%s209 + $0x18] sm:$0xff] %v315
        %324 = vst [vmem:[%s209 + $0x20] sm:$0xff] %v316
        %325 = vst [vmem:[%s209 + $0x28] sm:$0xff] %v317
        %326 = vst [vmem:[%s209 + $0x30] sm:$0xff] %v318
        %327 = vst [vmem:[%s209 + $0x38] sm:$0xff] %v319
        %s328 = sand.u32 %s113, 1
        %s329 = scalar_lea.sflag [#allocation5], %s328
        %s330 = sand.u32 %s113, 1
        %s331 = smul.addr %s330, 64
        %s332 = scalar_lea.vmem [#allocation6], %s331
        // Predicated region
        $region37: #{tpu_custom_call.1} parent=31 // pred_check
          %p333 = pneg %p123
        $region38: #{tpu_custom_call.1} parent=31 // pred_check_branch
          %335 = sbr.rel (%p333) target = $region40
        $region39: #{tpu_custom_call.1} parent=31 // pred_region
          %s336 = smul.u32 2, %s26
          %338 = vsyncadd %s329, 0
          %s339 = smul.addr %s25, 8
          %s340 = sadd.s32 %s336, %s339
          %s341 = smul.addr %s340, 8
          %s342 = scalar_lea.hbm %s3, %s341
          %s343 = sshll.u32 %s332, 4
          %s344 = int_to_ptr.vmem [resolvable:$true] %s343
          %s345 = sshll.u32 %s342, 4
          %s346 = int_to_ptr.hbm [resolvable:$true] %s345
          %351 = dma.vmem_to_hbm [thread:$0]  %s344, 1024, %s346, %s329, 256, 256, 16
        $region40: #{tpu_custom_call.1} parent=31 // pred_fallthru
          _
      $region32: #{tpu_custom_call.1} parent=5 // pred_fallthru
        _
      %p352 = scmp.le.s32.totalorder 2, %s16
      // Predicated region
      $region41: #{tpu_custom_call.1} parent=5 // pred_check
        %p353 = pneg %p352
      $region42: #{tpu_custom_call.1} parent=5 // pred_check_branch
        %355 = sbr.rel (%p353) target = $region44
      $region43: #{tpu_custom_call.1} parent=5 // pred_region
        %s356 = ssub.s32 %s16, 2
        // Predicated region
        $region45: #{tpu_custom_call.1} parent=43 // pred_check
          %p357 = pneg %p129
        $region46: #{tpu_custom_call.1} parent=43 // pred_check_branch
          %359 = sbr.rel (%p357) target = $region48
        $region47: #{tpu_custom_call.1} parent=43 // pred_region
          %s360 = sand.u32 %s114, 1
          %s361 = scalar_lea.sflag [#allocation5], %s360
          %s362 = sand.u32 %s114, 1
          %s363 = smul.addr %s362, 64
          %s364 = scalar_lea.vmem [#allocation6], %s363
          %366 = dma.done %s361, 1024
        $region48: #{tpu_custom_call.1} parent=43 // pred_fallthru
          _
      $region44: #{tpu_custom_call.1} parent=5 // pred_fallthru
        _
    $region6: #{tpu_custom_call.1} parent=1 // loop_footer
      %s20 = sadd.s32 1, %s16
    $region7: #{tpu_custom_call.1} parent=1 // loop_footer_branch
      %15 = sbr.rel target = $region3
    $region8: #{tpu_custom_call.1} parent=1 // loop_exit
      _
    %367 = vsyncpa [#allocation4], 1
    %s368 = scalar_lea.sflag [#allocation4], 1
    %369 = vsyncpa %s368, 1
    %370 = vsyncpa [#allocation5], 1
    %s371 = scalar_lea.sflag [#allocation5], 1
    %372 = vsyncpa %s371, 1

</llo_original>
